<compile_context>
chip_gen: v5e
topology: v5e:2x2
jax: 0.10.0
libtpu: 0.0.40
codegen_flags: <defaults>
</compile_context>

<pallas_src>
import jax
import jax.numpy as jnp
from jax.experimental import pallas as pl
from jax.experimental.pallas import tpu as pltpu

LANE = 128  # pad hidden / feature width to one full lane tile


# ----------------------------- fused Pallas kernel ------------------------------ #

def gcn_fused_kernel(a_ref, x_ref, p_ref, w_ref, c_ref, o_ref):
    a = a_ref[...]                       # (N, N) f32 adjacency, A[t, s] = edge multiplicity
    nclasses = o_ref.shape[1]

    def graphconv(h, li):
        # agg[t] = sum_{(s->t)} h[s]; then two MXU dots summed (no VMEM concat round-trip).
        agg = jnp.dot(a, h, preferred_element_type=jnp.float32)
        return (jnp.dot(agg, w_ref[2 * li], preferred_element_type=jnp.float32)
                + jnp.dot(h, w_ref[2 * li + 1], preferred_element_type=jnp.float32))

    # conv1 -> relu -> bn1 (eval affine); dropout(training=False) is the identity.
    h = x_ref[...]                                                   # (N, 128) f32
    z = graphconv(h, 0) + c_ref[0:1, :]
    h = jnp.maximum(z, 0.0) * c_ref[1:2, :] + c_ref[2:3, :]
    # conv2 -> relu -> bn2
    z = graphconv(h, 1) + c_ref[3:4, :]
    h = jnp.maximum(z, 0.0) * c_ref[4:5, :] + c_ref[5:6, :]
    # conv3 (bn3 already folded into w_ref[4:6] / c_ref[6] offline - exact, no relu between)
    h = graphconv(h, 2) + c_ref[6:7, :]
    # global_mean_pool (indicator rows pre-scaled by 1/count) -> final Linear
    pooled = jnp.dot(p_ref[...], h, preferred_element_type=jnp.float32)        # (G, 128)
    logits = jnp.dot(pooled, w_ref[6], preferred_element_type=jnp.float32) + c_ref[7:8, :]
    o_ref[...] = logits[:, :nclasses]


# ------------------------------ wrapper ----------------------------------- #

def _full_spec(shape):
    return pl.BlockSpec(shape, lambda *_: (0,) * len(shape))


def gcn_fused(a, xp, p, w_slab, c_slab, num_classes):
    g = p.shape[0]
    args = (a, xp, p, w_slab, c_slab)
    return pl.pallas_call(
        gcn_fused_kernel,
        out_shape=jax.ShapeDtypeStruct((g, num_classes), jnp.float32),
        grid=(1,),
        in_specs=[_full_spec(v.shape) for v in args],
        out_specs=_full_spec((g, num_classes)),
        compiler_params=pltpu.CompilerParams(
            dimension_semantics=("arbitrary",),
            vmem_limit_bytes=32 * 1024 * 1024,
        ),
    )(*args)


# ------------------------------ params ------------------------------------ #

def init_params(key, num_features, hidden, num_classes):
    """Deterministic synthetic init (shapes match the PyTorch module)."""
    def lin_init(k, fan_in, fan_out):
        lim = 1.0 / jnp.sqrt(jnp.float32(fan_in))
        return jax.random.uniform(k, (fan_in, fan_out), jnp.float32, -lim, lim)

    ks = jax.random.split(key, 12)
    params = {"eps": 1e-5}
    dims = [(num_features, hidden), (hidden, hidden), (hidden, hidden)]
    for li, (fi, fo) in enumerate(dims, start=1):
        params[f"conv{li}_w_rel"] = lin_init(ks[3 * (li - 1) + 0], fi, fo)
        params[f"conv{li}_w_root"] = lin_init(ks[3 * (li - 1) + 1], fi, fo)
        params[f"conv{li}_b"] = lin_init(ks[3 * (li - 1) + 2], fi, fo)[0]
        # BatchNorm default init: gamma=1, beta=0, running_mean=0, running_var=1
        params[f"bn{li}_gamma"] = jnp.ones((fo,), jnp.float32)
        params[f"bn{li}_beta"] = jnp.zeros((fo,), jnp.float32)
        params[f"bn{li}_mean"] = jnp.zeros((fo,), jnp.float32)
        params[f"bn{li}_var"] = jnp.ones((fo,), jnp.float32)
    params["lin_w"] = lin_init(ks[9], hidden, num_classes)
    params["lin_b"] = lin_init(ks[10], hidden, num_classes)[0]
    return params


def fold_and_pack(params, num_features, hidden, num_classes, hp=LANE):
    """Offline: fold eval-mode BN3 into conv3, zero-pad to 128 lanes, pack into two slabs."""
    eps = params["eps"]

    def pad2(w):  # (rows, cols) -> (hp, hp) with zero padding (exact)
        return jnp.pad(w, ((0, hp - w.shape[0]), (0, hp - w.shape[1])))

    def pad1(v):
        return jnp.pad(v, (0, hp - v.shape[0]))

    def bn_affine(li):
        scale = params[f"bn{li}_gamma"] / jnp.sqrt(params[f"bn{li}_var"] + eps)
        shift = params[f"bn{li}_beta"] - params[f"bn{li}_mean"] * scale
        return scale, shift

    s1, t1 = bn_affine(1)
    s2, t2 = bn_affine(2)
    s3, t3 = bn_affine(3)

    # Weight slab: [W_rel1, W_root1, W_rel2, W_root2, W_rel3*s3, W_root3*s3, W_lin]
    w_slab = jnp.stack([
        pad2(params["conv1_w_rel"]),
        pad2(params["conv1_w_root"]),
        pad2(params["conv2_w_rel"]),
        pad2(params["conv2_w_root"]),
        pad2(params["conv3_w_rel"] * s3[None, :]),      # exact bn3 fold
        pad2(params["conv3_w_root"] * s3[None, :]),
        pad2(params["lin_w"]),
    ]).astype(jnp.float32)                              # (7, hp, hp)

    # Per-channel row slab: [b1, s1, t1, b2, s2, t2, b3*s3+t3, b_lin]
    c_slab = jnp.stack([
        pad1(params["conv1_b"]),
        pad1(s1),
        pad1(t1),
        pad1(params["conv2_b"]),
        pad1(s2),
        pad1(t2),
        pad1(params["conv3_b"] * s3 + t3),
        pad1(params["lin_b"]),
    ]).astype(jnp.float32)                              # (8, hp)

    return w_slab, c_slab


# ------------------------------ model glue --------------------------------- #

def gcn_forward(w_slab, c_slab, x, edge_index, batch, num_graphs, num_classes, hp=LANE):
    n, f = x.shape
    assert f <= hp, "num_features must fit in the lane-padded width"
    src, dst = edge_index[0], edge_index[1]
    # Dense 'add'-aggregation operator: A[target, source] += 1 (multi-edges supported).
    a = jnp.zeros((n, n), jnp.float32).at[dst, src].add(1.0)
    # Mean-pool indicator, rows pre-scaled by 1/count (removes a separate invc operand).
    onehot = jax.nn.one_hot(batch, num_graphs, dtype=jnp.float32)        # (N, G)
    counts = jnp.maximum(onehot.sum(axis=0), 1.0)                        # (G,)
    p = (onehot / counts[None, :]).T                                     # (G, N) f32
    xp = jnp.pad(x, ((0, 0), (0, hp - f)))                               # (N, hp) f32
    return gcn_fused(a, xp, p, w_slab, c_slab, num_classes)


# --------------------------------- main ------------------------------------- #

if __name__ == "__main__":
    N, NUM_FEATURES, HIDDEN, NUM_CLASSES, NUM_GRAPHS, E = 64, 16, 32, 4, 2, 128

    key = jax.random.PRNGKey(0)
    k_x, k_src, k_dst, k_param = jax.random.split(key, 4)

    x = jax.random.normal(k_x, (N, NUM_FEATURES), jnp.float32)
    src = jax.random.randint(k_src, (E,), 0, N)
    dst = jax.random.randint(k_dst, (E,), 0, N)
    edge_index = jnp.stack([src, dst])                     # (2, E), PyG convention
    batch = (jnp.arange(N) >= N // 2).astype(jnp.int32)    # two graphs of 32 nodes

    params = init_params(k_param, NUM_FEATURES, HIDDEN, NUM_CLASSES)
    w_slab, c_slab = fold_and_pack(params, NUM_FEATURES, HIDDEN, NUM_CLASSES)

    fwd = jax.jit(gcn_forward, static_argnums=(5, 6))
    logits = fwd(w_slab, c_slab, x, edge_index, batch, NUM_GRAPHS, NUM_CLASSES)
    jax.block_until_ready(logits)

    assert logits.shape == (NUM_GRAPHS, NUM_CLASSES)
    assert bool(jnp.all(jnp.isfinite(logits)))
    print("KERNEL_OK")
</pallas_src>

<mosaic_0001>
module attributes {stable_mosaic.version = 11 : i64} {
  func.func @gcn_fused_kernel(%arg0: i32, %arg1: memref<64x64xf32, #tpu.memory_space<vmem>>, %arg2: memref<64x128xf32, #tpu.memory_space<vmem>>, %arg3: memref<2x64xf32, #tpu.memory_space<vmem>>, %arg4: memref<7x128x128xf32, #tpu.memory_space<vmem>>, %arg5: memref<8x128xf32, #tpu.memory_space<vmem>>, %arg6: memref<2x4xf32, #tpu.memory_space<vmem>>) attributes {dimension_semantics = [#tpu.dimension_semantics<arbitrary>], iteration_bounds = array<i64: 1>, scalar_prefetch = 0 : i64, scratch_operands = 0 : i64, tpu.core_type = #tpu.core_type<tc>, window_params = [{pipeline_mode = #tpu.pipeline_mode<synchronous>, transform_indices = @transform_0, window_bounds = array<i64: 64, 64>}, {pipeline_mode = #tpu.pipeline_mode<synchronous>, transform_indices = @transform_1, window_bounds = array<i64: 64, 128>}, {pipeline_mode = #tpu.pipeline_mode<synchronous>, transform_indices = @transform_2, window_bounds = array<i64: 2, 64>}, {pipeline_mode = #tpu.pipeline_mode<synchronous>, transform_indices = @transform_3, window_bounds = array<i64: 7, 128, 128>}, {pipeline_mode = #tpu.pipeline_mode<synchronous>, transform_indices = @transform_4, window_bounds = array<i64: 8, 128>}, {pipeline_mode = #tpu.pipeline_mode<synchronous>, transform_indices = @transform_5, window_bounds = array<i64: 2, 4>}]} {
    %c0 = arith.constant 0 : index
    %c0_0 = arith.constant 0 : index
    %0 = vector.load %arg1[%c0, %c0_0] : memref<64x64xf32, #tpu.memory_space<vmem>>, vector<64x64xf32>
    %c0_1 = arith.constant 0 : index
    %c0_2 = arith.constant 0 : index
    %1 = vector.load %arg2[%c0_1, %c0_2] : memref<64x128xf32, #tpu.memory_space<vmem>>, vector<64x128xf32>
    %cst = arith.constant dense<0.000000e+00> : vector<64x128xf32>
    %2 = tpu.matmul %0, %1, %cst {dimension_numbers = #tpu.dot_dimension_numbers<[1], [0], [0], [1], [0, 0, 1, 1], [], []>} : vector<64x64xf32>, vector<64x128xf32>, vector<64x128xf32> -> vector<64x128xf32>
    %c0_3 = arith.constant 0 : index
    %c0_4 = arith.constant 0 : index
    %c0_5 = arith.constant 0 : index
    %3 = vector.load %arg4[%c0_3, %c0_4, %c0_5] : memref<7x128x128xf32, #tpu.memory_space<vmem>>, vector<1x128x128xf32>
    %4 = vector.shape_cast %3 : vector<1x128x128xf32> to vector<128x128xf32>
    %cst_6 = arith.constant dense<0.000000e+00> : vector<64x128xf32>
    %5 = tpu.matmul %2, %4, %cst_6 {dimension_numbers = #tpu.dot_dimension_numbers<[1], [0], [0], [1], [0, 0, 1, 1], [], []>} : vector<64x128xf32>, vector<128x128xf32>, vector<64x128xf32> -> vector<64x128xf32>
    %c1 = arith.constant 1 : index
    %c0_7 = arith.constant 0 : index
    %c0_8 = arith.constant 0 : index
    %6 = vector.load %arg4[%c1, %c0_7, %c0_8] : memref<7x128x128xf32, #tpu.memory_space<vmem>>, vector<1x128x128xf32>
    %7 = vector.shape_cast %6 : vector<1x128x128xf32> to vector<128x128xf32>
    %cst_9 = arith.constant dense<0.000000e+00> : vector<64x128xf32>
    %8 = tpu.matmul %1, %7, %cst_9 {dimension_numbers = #tpu.dot_dimension_numbers<[1], [0], [0], [1], [0, 0, 1, 1], [], []>} : vector<64x128xf32>, vector<128x128xf32>, vector<64x128xf32> -> vector<64x128xf32>
    %9 = arith.addf %5, %8 : vector<64x128xf32>
    %c0_10 = arith.constant 0 : index
    %c0_11 = arith.constant 0 : index
    %10 = vector.load %arg5[%c0_10, %c0_11] : memref<8x128xf32, #tpu.memory_space<vmem>>, vector<1x128xf32>
    %11 = vector.broadcast %10 : vector<1x128xf32> to vector<64x128xf32>
    %12 = arith.addf %9, %11 : vector<64x128xf32>
    %cst_12 = arith.constant 0.000000e+00 : f32
    %13 = vector.broadcast %cst_12 : f32 to vector<64x128xf32>
    %14 = arith.maximumf %12, %13 : vector<64x128xf32>
    %c1_13 = arith.constant 1 : index
    %c0_14 = arith.constant 0 : index
    %15 = vector.load %arg5[%c1_13, %c0_14] : memref<8x128xf32, #tpu.memory_space<vmem>>, vector<1x128xf32>
    %16 = vector.broadcast %15 : vector<1x128xf32> to vector<64x128xf32>
    %17 = arith.mulf %14, %16 : vector<64x128xf32>
    %c2 = arith.constant 2 : index
    %c0_15 = arith.constant 0 : index
    %18 = vector.load %arg5[%c2, %c0_15] : memref<8x128xf32, #tpu.memory_space<vmem>>, vector<1x128xf32>
    %19 = vector.broadcast %18 : vector<1x128xf32> to vector<64x128xf32>
    %20 = arith.addf %17, %19 : vector<64x128xf32>
    %cst_16 = arith.constant dense<0.000000e+00> : vector<64x128xf32>
    %21 = tpu.matmul %0, %20, %cst_16 {dimension_numbers = #tpu.dot_dimension_numbers<[1], [0], [0], [1], [0, 0, 1, 1], [], []>} : vector<64x64xf32>, vector<64x128xf32>, vector<64x128xf32> -> vector<64x128xf32>
    %c2_17 = arith.constant 2 : index
    %c0_18 = arith.constant 0 : index
    %c0_19 = arith.constant 0 : index
    %22 = vector.load %arg4[%c2_17, %c0_18, %c0_19] : memref<7x128x128xf32, #tpu.memory_space<vmem>>, vector<1x128x128xf32>
    %23 = vector.shape_cast %22 : vector<1x128x128xf32> to vector<128x128xf32>
    %cst_20 = arith.constant dense<0.000000e+00> : vector<64x128xf32>
    %24 = tpu.matmul %21, %23, %cst_20 {dimension_numbers = #tpu.dot_dimension_numbers<[1], [0], [0], [1], [0, 0, 1, 1], [], []>} : vector<64x128xf32>, vector<128x128xf32>, vector<64x128xf32> -> vector<64x128xf32>
    %c3 = arith.constant 3 : index
    %c0_21 = arith.constant 0 : index
    %c0_22 = arith.constant 0 : index
    %25 = vector.load %arg4[%c3, %c0_21, %c0_22] : memref<7x128x128xf32, #tpu.memory_space<vmem>>, vector<1x128x128xf32>
    %26 = vector.shape_cast %25 : vector<1x128x128xf32> to vector<128x128xf32>
    %cst_23 = arith.constant dense<0.000000e+00> : vector<64x128xf32>
    %27 = tpu.matmul %20, %26, %cst_23 {dimension_numbers = #tpu.dot_dimension_numbers<[1], [0], [0], [1], [0, 0, 1, 1], [], []>} : vector<64x128xf32>, vector<128x128xf32>, vector<64x128xf32> -> vector<64x128xf32>
    %28 = arith.addf %24, %27 : vector<64x128xf32>
    %c3_24 = arith.constant 3 : index
    %c0_25 = arith.constant 0 : index
    %29 = vector.load %arg5[%c3_24, %c0_25] : memref<8x128xf32, #tpu.memory_space<vmem>>, vector<1x128xf32>
    %30 = vector.broadcast %29 : vector<1x128xf32> to vector<64x128xf32>
    %31 = arith.addf %28, %30 : vector<64x128xf32>
    %cst_26 = arith.constant 0.000000e+00 : f32
    %32 = vector.broadcast %cst_26 : f32 to vector<64x128xf32>
    %33 = arith.maximumf %31, %32 : vector<64x128xf32>
    %c4 = arith.constant 4 : index
    %c0_27 = arith.constant 0 : index
    %34 = vector.load %arg5[%c4, %c0_27] : memref<8x128xf32, #tpu.memory_space<vmem>>, vector<1x128xf32>
    %35 = vector.broadcast %34 : vector<1x128xf32> to vector<64x128xf32>
    %36 = arith.mulf %33, %35 : vector<64x128xf32>
    %c5 = arith.constant 5 : index
    %c0_28 = arith.constant 0 : index
    %37 = vector.load %arg5[%c5, %c0_28] : memref<8x128xf32, #tpu.memory_space<vmem>>, vector<1x128xf32>
    %38 = vector.broadcast %37 : vector<1x128xf32> to vector<64x128xf32>
    %39 = arith.addf %36, %38 : vector<64x128xf32>
    %cst_29 = arith.constant dense<0.000000e+00> : vector<64x128xf32>
    %40 = tpu.matmul %0, %39, %cst_29 {dimension_numbers = #tpu.dot_dimension_numbers<[1], [0], [0], [1], [0, 0, 1, 1], [], []>} : vector<64x64xf32>, vector<64x128xf32>, vector<64x128xf32> -> vector<64x128xf32>
    %c4_30 = arith.constant 4 : index
    %c0_31 = arith.constant 0 : index
    %c0_32 = arith.constant 0 : index
    %41 = vector.load %arg4[%c4_30, %c0_31, %c0_32] : memref<7x128x128xf32, #tpu.memory_space<vmem>>, vector<1x128x128xf32>
    %42 = vector.shape_cast %41 : vector<1x128x128xf32> to vector<128x128xf32>
    %cst_33 = arith.constant dense<0.000000e+00> : vector<64x128xf32>
    %43 = tpu.matmul %40, %42, %cst_33 {dimension_numbers = #tpu.dot_dimension_numbers<[1], [0], [0], [1], [0, 0, 1, 1], [], []>} : vector<64x128xf32>, vector<128x128xf32>, vector<64x128xf32> -> vector<64x128xf32>
    %c5_34 = arith.constant 5 : index
    %c0_35 = arith.constant 0 : index
    %c0_36 = arith.constant 0 : index
    %44 = vector.load %arg4[%c5_34, %c0_35, %c0_36] : memref<7x128x128xf32, #tpu.memory_space<vmem>>, vector<1x128x128xf32>
    %45 = vector.shape_cast %44 : vector<1x128x128xf32> to vector<128x128xf32>
    %cst_37 = arith.constant dense<0.000000e+00> : vector<64x128xf32>
    %46 = tpu.matmul %39, %45, %cst_37 {dimension_numbers = #tpu.dot_dimension_numbers<[1], [0], [0], [1], [0, 0, 1, 1], [], []>} : vector<64x128xf32>, vector<128x128xf32>, vector<64x128xf32> -> vector<64x128xf32>
    %47 = arith.addf %43, %46 : vector<64x128xf32>
    %c6 = arith.constant 6 : index
    %c0_38 = arith.constant 0 : index
    %48 = vector.load %arg5[%c6, %c0_38] : memref<8x128xf32, #tpu.memory_space<vmem>>, vector<1x128xf32>
    %49 = vector.broadcast %48 : vector<1x128xf32> to vector<64x128xf32>
    %50 = arith.addf %47, %49 : vector<64x128xf32>
    %c0_39 = arith.constant 0 : index
    %c0_40 = arith.constant 0 : index
    %51 = vector.load %arg3[%c0_39, %c0_40] : memref<2x64xf32, #tpu.memory_space<vmem>>, vector<2x64xf32>
    %cst_41 = arith.constant dense<0.000000e+00> : vector<2x128xf32>
    %52 = tpu.matmul %51, %50, %cst_41 {dimension_numbers = #tpu.dot_dimension_numbers<[1], [0], [0], [1], [0, 0, 1, 1], [], []>} : vector<2x64xf32>, vector<64x128xf32>, vector<2x128xf32> -> vector<2x128xf32>
    %c6_42 = arith.constant 6 : index
    %c0_43 = arith.constant 0 : index
    %c0_44 = arith.constant 0 : index
    %53 = vector.load %arg4[%c6_42, %c0_43, %c0_44] : memref<7x128x128xf32, #tpu.memory_space<vmem>>, vector<1x128x128xf32>
    %54 = vector.shape_cast %53 : vector<1x128x128xf32> to vector<128x128xf32>
    %cst_45 = arith.constant dense<0.000000e+00> : vector<2x128xf32>
    %55 = tpu.matmul %52, %54, %cst_45 {dimension_numbers = #tpu.dot_dimension_numbers<[1], [0], [0], [1], [0, 0, 1, 1], [], []>} : vector<2x128xf32>, vector<128x128xf32>, vector<2x128xf32> -> vector<2x128xf32>
    %c7 = arith.constant 7 : index
    %c0_46 = arith.constant 0 : index
    %56 = vector.load %arg5[%c7, %c0_46] : memref<8x128xf32, #tpu.memory_space<vmem>>, vector<1x128xf32>
    %57 = vector.broadcast %56 : vector<1x128xf32> to vector<2x128xf32>
    %58 = arith.addf %55, %57 : vector<2x128xf32>
    %59 = vector.extract_strided_slice %58 {offsets = [0, 0], sizes = [2, 4], strides = [1, 1]} : vector<2x128xf32> to vector<2x4xf32>
    %c0_47 = arith.constant 0 : index
    %c0_48 = arith.constant 0 : index
    %60 = vector.load %arg6[%c0_47, %c0_48] : memref<2x4xf32, #tpu.memory_space<vmem>>, vector<2x4xf32>
    tpu.vector_store %arg6[%c0_47, %c0_48], %59 {strides = array<i32>} : memref<2x4xf32, #tpu.memory_space<vmem>>, vector<2x4xf32>,
    return
  }
  func.func @transform_0(%arg0: i32) -> (i32, i32) {
    %c0_i32 = arith.constant 0 : i32
    %c0_i32_0 = arith.constant 0 : i32
    %c0_i32_1 = arith.constant 0 : i32
    return %c0_i32, %c0_i32_0 : i32, i32
  }
  func.func @transform_1(%arg0: i32) -> (i32, i32) {
    %c0_i32 = arith.constant 0 : i32
    %c0_i32_0 = arith.constant 0 : i32
    %c0_i32_1 = arith.constant 0 : i32
    return %c0_i32, %c0_i32_0 : i32, i32
  }
  func.func @transform_2(%arg0: i32) -> (i32, i32) {
    %c0_i32 = arith.constant 0 : i32
    %c0_i32_0 = arith.constant 0 : i32
    %c0_i32_1 = arith.constant 0 : i32
    return %c0_i32, %c0_i32_0 : i32, i32
  }
  func.func @transform_3(%arg0: i32) -> (i32, i32, i32) {
    %c0_i32 = arith.constant 0 : i32
    %c0_i32_0 = arith.constant 0 : i32
    %c0_i32_1 = arith.constant 0 : i32
    %c0_i32_2 = arith.constant 0 : i32
    return %c0_i32, %c0_i32_0, %c0_i32_1 : i32, i32, i32
  }
  func.func @transform_4(%arg0: i32) -> (i32, i32) {
    %c0_i32 = arith.constant 0 : i32
    %c0_i32_0 = arith.constant 0 : i32
    %c0_i32_1 = arith.constant 0 : i32
    return %c0_i32, %c0_i32_0 : i32, i32
  }
  func.func @transform_5(%arg0: i32) -> (i32, i32) {
    %c0_i32 = arith.constant 0 : i32
    %c0_i32_0 = arith.constant 0 : i32
    %c0_i32_1 = arith.constant 0 : i32
    return %c0_i32, %c0_i32_0 : i32, i32
  }
}

</mosaic_0001>

<llo_original>
// kernel: gcn_forward.1
$region0: #{gcn_forward.1}
  #allocation0 [shape = 'u32[]', space=smem, size = 0x4, offset = 0x4, fixed_abs, tag = 'smem constant byte address 0x4 - core index']
  #allocation1 [shape = 'u32[72,128]{1,0:T(1,128)}', space=vmem, size = 0x9000, scoped, tag = 'internal scratch']
  %s0 = inlined_call_operand.vmem [shape: f32[64,64], index: 0, kind: input, shape index: {}]
  %s1 = inlined_call_operand.vmem [shape: f32[64,128], index: 1, kind: input, shape index: {}]
  %s2 = inlined_call_operand.vmem [shape: f32[2,64], index: 2, kind: input, shape index: {}]
  %s3 = inlined_call_operand.vmem [shape: f32[7,128,128], index: 3, kind: input, shape index: {}]
  %s4 = inlined_call_operand.vmem [shape: f32[8,128], index: 4, kind: input, shape index: {}]
  %s5 = inlined_call_operand.hbm [shape: f32[2,4], index: 5, kind: output, shape index: {}]
  %s6 = sld [smem:[#allocation0]]
  $region30: #{gcn_forward.1} parent=0
    _
  %s8 = ssub.s32 1, %s6
  %s9 = scalar_select 0, %s8, %s6
  $region1: #{gcn_forward.1} parent=0
    #allocation2 [shape = 'u8[1024]{0}', space=vmem, size = 0x400, scoped, tag = 'output window, operand 0, single buffered']
    #allocation3 [shape = 's32[1]{0}', space=sflag, size = 0x4, scoped, tag = 'scoped memory for gcn_forward.1']
    %10 = vsyncpa [#allocation3], 0
    // Predicated region
    $region2: #{gcn_forward.1} parent=1 // pred_check
      _
    $region3: #{gcn_forward.1} parent=1 // pred_check_branch
      %12 = sbr.rel (0) target = $region5
    $region4: #{gcn_forward.1} parent=1 // pred_region
      _
    $region5: #{gcn_forward.1} parent=1 // pred_fallthru
      _
    // Predicated region
    $region6: #{gcn_forward.1} parent=1 // pred_check
      _
    $region7: #{gcn_forward.1} parent=1 // pred_check_branch
      %14 = sbr.rel (0) target = $region9
    $region8: #{gcn_forward.1} parent=1 // pred_region
      _
    $region9: #{gcn_forward.1} parent=1 // pred_fallthru
      _
    // Predicated region
    $region10: #{gcn_forward.1} parent=1 // pred_check
      _
    $region11: #{gcn_forward.1} parent=1 // pred_check_branch
      %16 = sbr.rel (0) target = $region13
    $region12: #{gcn_forward.1} parent=1 // pred_region
      _
    $region13: #{gcn_forward.1} parent=1 // pred_fallthru
      _
    // Predicated region
    $region14: #{gcn_forward.1} parent=1 // pred_check
      _
    $region15: #{gcn_forward.1} parent=1 // pred_check_branch
      %18 = sbr.rel (0) target = $region17
    $region16: #{gcn_forward.1} parent=1 // pred_region
      _
    $region17: #{gcn_forward.1} parent=1 // pred_fallthru
      _
    // Predicated region
    $region18: #{gcn_forward.1} parent=1 // pred_check
      _
    $region19: #{gcn_forward.1} parent=1 // pred_check_branch
      %20 = sbr.rel (0) target = $region21
    $region20: #{gcn_forward.1} parent=1 // pred_region
      _
    $region21: #{gcn_forward.1} parent=1 // pred_fallthru
      _
    %v21 = vld [vmem:[%s0] sm:$0xff]
    %v22 = vld [vmem:[%s0 + $0x8] sm:$0xff]
    %v23 = vld [vmem:[%s0 + $0x10] sm:$0xff]
    %v24 = vld [vmem:[%s0 + $0x18] sm:$0xff]
    %v25 = vld [vmem:[%s0 + $0x20] sm:$0xff]
    %v26 = vld [vmem:[%s0 + $0x28] sm:$0xff]
    %v27 = vld [vmem:[%s0 + $0x30] sm:$0xff]
    %v28 = vld [vmem:[%s0 + $0x38] sm:$0xff]
    %v29 = vld [vmem:[%s1] sm:$0xff]
    %v30 = vld [vmem:[%s1 + $0x8] sm:$0xff]
    %v31 = vld [vmem:[%s1 + $0x10] sm:$0xff]
    %v32 = vld [vmem:[%s1 + $0x18] sm:$0xff]
    %v33 = vld [vmem:[%s1 + $0x20] sm:$0xff]
    %v34 = vld [vmem:[%s1 + $0x28] sm:$0xff]
    %v35 = vld [vmem:[%s1 + $0x30] sm:$0xff]
    %v36 = vld [vmem:[%s1 + $0x38] sm:$0xff]
    %vm37 = vcmask 523264
    %v39 = vsel %vm37, %v21, 0
    %v42 = vsel %vm37, %v22, 0
    %v45 = vsel %vm37, %v23, 0
    %v48 = vsel %vm37, %v24, 0
    %v51 = vsel %vm37, %v25, 0
    %v54 = vsel %vm37, %v26, 0
    %v57 = vsel %vm37, %v27, 0
    %v60 = vsel %vm37, %v28, 0
    %62 = vmatpush.msra.mxu0 0.0
    %63 = vmatpush.msra.mxu0 0.0
    %64 = vmatpush.msra.mxu0 0.0
    %65 = vmatpush.msra.mxu0 0.0
    %66 = vmatpush.msra.mxu0 0.0
    %67 = vmatpush.msra.mxu0 0.0
    %68 = vmatpush.msra.mxu0 0.0
    %69 = vmatpush.msra.mxu0 0.0
    %70 = vmatpush.msra.mxu0 %v36
    %71 = vmatpush.msra.mxu0 %v35
    %72 = vmatpush.msra.mxu0 %v34
    %73 = vmatpush.msra.mxu0 %v33
    %74 = vmatpush.msra.mxu0 %v32
    %75 = vmatpush.msra.mxu0 %v31
    %76 = vmatpush.msra.mxu0 %v30
    %77 = vmatpush.msra.mxu0 %v29
    %78 = vmatmul.f32.gmra.mxu0 %v39
    %v79 = vpop.f32.mrf.mxu0
    %v80 = vadd.f32 0.0, %v79
    %81 = vmatmul.f32.gmra.mxu0 %v42
    %v82 = vpop.f32.mrf.mxu0
    %v83 = vadd.f32 0.0, %v82
    %84 = vmatmul.f32.gmra.mxu0 %v45
    %v85 = vpop.f32.mrf.mxu0
    %v86 = vadd.f32 0.0, %v85
    %87 = vmatmul.f32.gmra.mxu0 %v48
    %v88 = vpop.f32.mrf.mxu0
    %v89 = vadd.f32 0.0, %v88
    %90 = vmatmul.f32.gmra.mxu0 %v51
    %v91 = vpop.f32.mrf.mxu0
    %v92 = vadd.f32 0.0, %v91
    %93 = vmatmul.f32.gmra.mxu0 %v54
    %v94 = vpop.f32.mrf.mxu0
    %v95 = vadd.f32 0.0, %v94
    %96 = vmatmul.f32.gmra.mxu0 %v57
    %v97 = vpop.f32.mrf.mxu0
    %v98 = vadd.f32 0.0, %v97
    %99 = vmatmul.f32.gmra.mxu0 %v60
    %v100 = vpop.f32.mrf.mxu0
    %v101 = vadd.f32 0.0, %v100
    %102 = vdwg.mxu0
    %v103 = vld [vmem:[%s3] sm:$0xff]
    %v104 = vld [vmem:[%s3 + $0x8] sm:$0xff]
    %v105 = vld [vmem:[%s3 + $0x10] sm:$0xff]
    %v106 = vld [vmem:[%s3 + $0x18] sm:$0xff]
    %v107 = vld [vmem:[%s3 + $0x20] sm:$0xff]
    %v108 = vld [vmem:[%s3 + $0x28] sm:$0xff]
    %v109 = vld [vmem:[%s3 + $0x30] sm:$0xff]
    %v110 = vld [vmem:[%s3 + $0x38] sm:$0xff]
    %v111 = vld [vmem:[%s3 + $0x40] sm:$0xff]
    %v112 = vld [vmem:[%s3 + $0x48] sm:$0xff]
    %v113 = vld [vmem:[%s3 + $0x50] sm:$0xff]
    %v114 = vld [vmem:[%s3 + $0x58] sm:$0xff]
    %v115 = vld [vmem:[%s3 + $0x60] sm:$0xff]
    %v116 = vld [vmem:[%s3 + $0x68] sm:$0xff]
    %v117 = vld [vmem:[%s3 + $0x70] sm:$0xff]
    %v118 = vld [vmem:[%s3 + $0x78] sm:$0xff]
    %s119 = scalar_lea.vmem %s3, 128
    %v120 = vld [vmem:[%s119] sm:$0xff]
    %v121 = vld [vmem:[%s119 + $0x8] sm:$0xff]
    %v122 = vld [vmem:[%s119 + $0x10] sm:$0xff]
    %v123 = vld [vmem:[%s119 + $0x18] sm:$0xff]
    %v124 = vld [vmem:[%s119 + $0x20] sm:$0xff]
    %v125 = vld [vmem:[%s119 + $0x28] sm:$0xff]
    %v126 = vld [vmem:[%s119 + $0x30] sm:$0xff]
    %v127 = vld [vmem:[%s119 + $0x38] sm:$0xff]
    %v128 = vld [vmem:[%s119 + $0x40] sm:$0xff]
    %v129 = vld [vmem:[%s119 + $0x48] sm:$0xff]
    %v130 = vld [vmem:[%s119 + $0x50] sm:$0xff]
    %v131 = vld [vmem:[%s119 + $0x58] sm:$0xff]
    %v132 = vld [vmem:[%s119 + $0x60] sm:$0xff]
    %v133 = vld [vmem:[%s119 + $0x68] sm:$0xff]
    %v134 = vld [vmem:[%s119 + $0x70] sm:$0xff]
    %v135 = vld [vmem:[%s119 + $0x78] sm:$0xff]
    %136 = vmatpush.msra.mxu0 %v135
    %137 = vmatpush.msra.mxu0 %v134
    %138 = vmatpush.msra.mxu0 %v133
    %139 = vmatpush.msra.mxu0 %v132
    %140 = vmatpush.msra.mxu0 %v131
    %141 = vmatpush.msra.mxu0 %v130
    %142 = vmatpush.msra.mxu0 %v129
    %143 = vmatpush.msra.mxu0 %v128
    %144 = vmatpush.msra.mxu0 %v127
    %145 = vmatpush.msra.mxu0 %v126
    %146 = vmatpush.msra.mxu0 %v125
    %147 = vmatpush.msra.mxu0 %v124
    %148 = vmatpush.msra.mxu0 %v123
    %149 = vmatpush.msra.mxu0 %v122
    %150 = vmatpush.msra.mxu0 %v121
    %151 = vmatpush.msra.mxu0 %v120
    %152 = vmatmul.f32.gmra.mxu0 %v29
    %v153 = vpop.f32.mrf.mxu0
    %v154 = vadd.f32 0.0, %v153
    %155 = vmatmul.f32.gmra.mxu0 %v30
    %v156 = vpop.f32.mrf.mxu0
    %v157 = vadd.f32 0.0, %v156
    %158 = vmatmul.f32.gmra.mxu0 %v31
    %v159 = vpop.f32.mrf.mxu0
    %v160 = vadd.f32 0.0, %v159
    %161 = vmatmul.f32.gmra.mxu0 %v32
    %v162 = vpop.f32.mrf.mxu0
    %v163 = vadd.f32 0.0, %v162
    %164 = vmatmul.f32.gmra.mxu0 %v33
    %v165 = vpop.f32.mrf.mxu0
    %v166 = vadd.f32 0.0, %v165
    %167 = vmatmul.f32.gmra.mxu0 %v34
    %v168 = vpop.f32.mrf.mxu0
    %v169 = vadd.f32 0.0, %v168
    %170 = vmatmul.f32.gmra.mxu0 %v35
    %v171 = vpop.f32.mrf.mxu0
    %v172 = vadd.f32 0.0, %v171
    %173 = vmatmul.f32.gmra.mxu0 %v36
    %v174 = vpop.f32.mrf.mxu0
    %v175 = vadd.f32 0.0, %v174
    %176 = vdwg.mxu0
    %177 = vmatpush.msra.mxu0 %v118
    %178 = vmatpush.msra.mxu0 %v117
    %179 = vmatpush.msra.mxu0 %v116
    %180 = vmatpush.msra.mxu0 %v115
    %181 = vmatpush.msra.mxu0 %v114
    %182 = vmatpush.msra.mxu0 %v113
    %183 = vmatpush.msra.mxu0 %v112
    %184 = vmatpush.msra.mxu0 %v111
    %185 = vmatpush.msra.mxu0 %v110
    %186 = vmatpush.msra.mxu0 %v109
    %187 = vmatpush.msra.mxu0 %v108
    %188 = vmatpush.msra.mxu0 %v107
    %189 = vmatpush.msra.mxu0 %v106
    %190 = vmatpush.msra.mxu0 %v105
    %191 = vmatpush.msra.mxu0 %v104
    %192 = vmatpush.msra.mxu0 %v103
    %193 = vmatmul.f32.gmra.mxu0 %v80
    %v194 = vpop.f32.mrf.mxu0
    %v195 = vadd.f32 %v154, %v194
    %196 = vmatmul.f32.gmra.mxu0 %v83
    %v197 = vpop.f32.mrf.mxu0
    %v198 = vadd.f32 %v157, %v197
    %199 = vmatmul.f32.gmra.mxu0 %v86
    %v200 = vpop.f32.mrf.mxu0
    %v201 = vadd.f32 %v160, %v200
    %202 = vmatmul.f32.gmra.mxu0 %v89
    %v203 = vpop.f32.mrf.mxu0
    %v204 = vadd.f32 %v163, %v203
    %205 = vmatmul.f32.gmra.mxu0 %v92
    %v206 = vpop.f32.mrf.mxu0
    %v207 = vadd.f32 %v166, %v206
    %208 = vmatmul.f32.gmra.mxu0 %v95
    %v209 = vpop.f32.mrf.mxu0
    %v210 = vadd.f32 %v169, %v209
    %211 = vmatmul.f32.gmra.mxu0 %v98
    %v212 = vpop.f32.mrf.mxu0
    %v213 = vadd.f32 %v172, %v212
    %214 = vmatmul.f32.gmra.mxu0 %v101
    %v215 = vpop.f32.mrf.mxu0
    %v216 = vadd.f32 %v175, %v215
    %217 = vdwg.mxu0
    %v218 = vld [vmem:[%s4] sm:$0x1]
    %v219 = vperm.slane %v218, 0
    %v220 = vadd.f32 %v195, %v219
    %v221 = vadd.f32 %v198, %v219
    %v222 = vadd.f32 %v201, %v219
    %v223 = vadd.f32 %v204, %v219
    %v224 = vadd.f32 %v207, %v219
    %v225 = vadd.f32 %v210, %v219
    %v226 = vadd.f32 %v213, %v219
    %v227 = vadd.f32 %v216, %v219
    %v228 = vmax.f32 %v220, 0.0
    %v229 = vmax.f32 %v221, 0.0
    %v230 = vmax.f32 %v222, 0.0
    %v231 = vmax.f32 %v223, 0.0
    %v232 = vmax.f32 %v224, 0.0
    %v233 = vmax.f32 %v225, 0.0
    %v234 = vmax.f32 %v226, 0.0
    %v235 = vmax.f32 %v227, 0.0
    %v236 = vld [vmem:[%s4 + $0x1] sm:$0x1]
    %v237 = vperm.slane %v236, 0
    %v238 = vmul.f32 %v228, %v237
    %v239 = vmul.f32 %v229, %v237
    %v240 = vmul.f32 %v230, %v237
    %v241 = vmul.f32 %v231, %v237
    %v242 = vmul.f32 %v232, %v237
    %v243 = vmul.f32 %v233, %v237
    %v244 = vmul.f32 %v234, %v237
    %v245 = vmul.f32 %v235, %v237
    %v246 = vld [vmem:[%s4 + $0x2] sm:$0x1]
    %v247 = vperm.slane %v246, 0
    %v248 = vadd.f32 %v238, %v247
    %v249 = vadd.f32 %v239, %v247
    %v250 = vadd.f32 %v240, %v247
    %v251 = vadd.f32 %v241, %v247
    %v252 = vadd.f32 %v242, %v247
    %v253 = vadd.f32 %v243, %v247
    %v254 = vadd.f32 %v244, %v247
    %v255 = vadd.f32 %v245, %v247
    %256 = vmatpush.msra.mxu0 0.0
    %257 = vmatpush.msra.mxu0 0.0
    %258 = vmatpush.msra.mxu0 0.0
    %259 = vmatpush.msra.mxu0 0.0
    %260 = vmatpush.msra.mxu0 0.0
    %261 = vmatpush.msra.mxu0 0.0
    %262 = vmatpush.msra.mxu0 0.0
    %263 = vmatpush.msra.mxu0 0.0
    %264 = vmatpush.msra.mxu0 %v255
    %265 = vmatpush.msra.mxu0 %v254
    %266 = vmatpush.msra.mxu0 %v253
    %267 = vmatpush.msra.mxu0 %v252
    %268 = vmatpush.msra.mxu0 %v251
    %269 = vmatpush.msra.mxu0 %v250
    %270 = vmatpush.msra.mxu0 %v249
    %271 = vmatpush.msra.mxu0 %v248
    %272 = vmatmul.f32.gmra.mxu0 %v39
    %v273 = vpop.f32.mrf.mxu0
    %v274 = vadd.f32 0.0, %v273
    %275 = vmatmul.f32.gmra.mxu0 %v42
    %v276 = vpop.f32.mrf.mxu0
    %v277 = vadd.f32 0.0, %v276
    %278 = vmatmul.f32.gmra.mxu0 %v45
    %v279 = vpop.f32.mrf.mxu0
    %v280 = vadd.f32 0.0, %v279
    %281 = vmatmul.f32.gmra.mxu0 %v48
    %v282 = vpop.f32.mrf.mxu0
    %v283 = vadd.f32 0.0, %v282
    %284 = vmatmul.f32.gmra.mxu0 %v51
    %v285 = vpop.f32.mrf.mxu0
    %v286 = vadd.f32 0.0, %v285
    %287 = vmatmul.f32.gmra.mxu0 %v54
    %v288 = vpop.f32.mrf.mxu0
    %v289 = vadd.f32 0.0, %v288
    %290 = vmatmul.f32.gmra.mxu0 %v57
    %v291 = vpop.f32.mrf.mxu0
    %v292 = vadd.f32 0.0, %v291
    %293 = vmatmul.f32.gmra.mxu0 %v60
    %v294 = vpop.f32.mrf.mxu0
    %v295 = vadd.f32 0.0, %v294
    %296 = vdwg.mxu0
    %s297 = scalar_lea.vmem %s3, 256
    %v298 = vld [vmem:[%s297] sm:$0xff]
    %v299 = vld [vmem:[%s297 + $0x8] sm:$0xff]
    %v300 = vld [vmem:[%s297 + $0x10] sm:$0xff]
    %v301 = vld [vmem:[%s297 + $0x18] sm:$0xff]
    %v302 = vld [vmem:[%s297 + $0x20] sm:$0xff]
    %v303 = vld [vmem:[%s297 + $0x28] sm:$0xff]
    %v304 = vld [vmem:[%s297 + $0x30] sm:$0xff]
    %v305 = vld [vmem:[%s297 + $0x38] sm:$0xff]
    %v306 = vld [vmem:[%s297 + $0x40] sm:$0xff]
    %v307 = vld [vmem:[%s297 + $0x48] sm:$0xff]
    %v308 = vld [vmem:[%s297 + $0x50] sm:$0xff]
    %v309 = vld [vmem:[%s297 + $0x58] sm:$0xff]
    %v310 = vld [vmem:[%s297 + $0x60] sm:$0xff]
    %v311 = vld [vmem:[%s297 + $0x68] sm:$0xff]
    %v312 = vld [vmem:[%s297 + $0x70] sm:$0xff]
    %v313 = vld [vmem:[%s297 + $0x78] sm:$0xff]
    %s314 = scalar_lea.vmem %s3, 384
    %v315 = vld [vmem:[%s314] sm:$0xff]
    %v316 = vld [vmem:[%s314 + $0x8] sm:$0xff]
    %v317 = vld [vmem:[%s314 + $0x10] sm:$0xff]
    %v318 = vld [vmem:[%s314 + $0x18] sm:$0xff]
    %v319 = vld [vmem:[%s314 + $0x20] sm:$0xff]
    %v320 = vld [vmem:[%s314 + $0x28] sm:$0xff]
    %v321 = vld [vmem:[%s314 + $0x30] sm:$0xff]
    %v322 = vld [vmem:[%s314 + $0x38] sm:$0xff]
    %v323 = vld [vmem:[%s314 + $0x40] sm:$0xff]
    %v324 = vld [vmem:[%s314 + $0x48] sm:$0xff]
    %v325 = vld [vmem:[%s314 + $0x50] sm:$0xff]
    %v326 = vld [vmem:[%s314 + $0x58] sm:$0xff]
    %v327 = vld [vmem:[%s314 + $0x60] sm:$0xff]
    %v328 = vld [vmem:[%s314 + $0x68] sm:$0xff]
    %v329 = vld [vmem:[%s314 + $0x70] sm:$0xff]
    %v330 = vld [vmem:[%s314 + $0x78] sm:$0xff]
    %331 = vmatpush.msra.mxu0 %v330
    %332 = vmatpush.msra.mxu0 %v329
    %333 = vmatpush.msra.mxu0 %v328
    %334 = vmatpush.msra.mxu0 %v327
    %335 = vmatpush.msra.mxu0 %v326
    %336 = vmatpush.msra.mxu0 %v325
    %337 = vmatpush.msra.mxu0 %v324
    %338 = vmatpush.msra.mxu0 %v323
    %339 = vmatpush.msra.mxu0 %v322
    %340 = vmatpush.msra.mxu0 %v321
    %341 = vmatpush.msra.mxu0 %v320
    %342 = vmatpush.msra.mxu0 %v319
    %343 = vmatpush.msra.mxu0 %v318
    %344 = vmatpush.msra.mxu0 %v317
    %345 = vmatpush.msra.mxu0 %v316
    %346 = vmatpush.msra.mxu0 %v315
    %347 = vmatmul.f32.gmra.mxu0 %v248
    %v348 = vpop.f32.mrf.mxu0
    %v349 = vadd.f32 0.0, %v348
    %350 = vmatmul.f32.gmra.mxu0 %v249
    %v351 = vpop.f32.mrf.mxu0
    %v352 = vadd.f32 0.0, %v351
    %353 = vmatmul.f32.gmra.mxu0 %v250
    %v354 = vpop.f32.mrf.mxu0
    %v355 = vadd.f32 0.0, %v354
    %356 = vmatmul.f32.gmra.mxu0 %v251
    %v357 = vpop.f32.mrf.mxu0
    %v358 = vadd.f32 0.0, %v357
    %359 = vmatmul.f32.gmra.mxu0 %v252
    %v360 = vpop.f32.mrf.mxu0
    %v361 = vadd.f32 0.0, %v360
    %362 = vmatmul.f32.gmra.mxu0 %v253
    %v363 = vpop.f32.mrf.mxu0
    %v364 = vadd.f32 0.0, %v363
    %365 = vmatmul.f32.gmra.mxu0 %v254
    %v366 = vpop.f32.mrf.mxu0
    %v367 = vadd.f32 0.0, %v366
    %368 = vmatmul.f32.gmra.mxu0 %v255
    %v369 = vpop.f32.mrf.mxu0
    %v370 = vadd.f32 0.0, %v369
    %371 = vdwg.mxu0
    %372 = vmatpush.msra.mxu0 %v313
    %373 = vmatpush.msra.mxu0 %v312
    %374 = vmatpush.msra.mxu0 %v311
    %375 = vmatpush.msra.mxu0 %v310
    %376 = vmatpush.msra.mxu0 %v309
    %377 = vmatpush.msra.mxu0 %v308
    %378 = vmatpush.msra.mxu0 %v307
    %379 = vmatpush.msra.mxu0 %v306
    %380 = vmatpush.msra.mxu0 %v305
    %381 = vmatpush.msra.mxu0 %v304
    %382 = vmatpush.msra.mxu0 %v303
    %383 = vmatpush.msra.mxu0 %v302
    %384 = vmatpush.msra.mxu0 %v301
    %385 = vmatpush.msra.mxu0 %v300
    %386 = vmatpush.msra.mxu0 %v299
    %387 = vmatpush.msra.mxu0 %v298
    %388 = vmatmul.f32.gmra.mxu0 %v274
    %v389 = vpop.f32.mrf.mxu0
    %v390 = vadd.f32 %v349, %v389
    %391 = vmatmul.f32.gmra.mxu0 %v277
    %v392 = vpop.f32.mrf.mxu0
    %v393 = vadd.f32 %v352, %v392
    %394 = vmatmul.f32.gmra.mxu0 %v280
    %v395 = vpop.f32.mrf.mxu0
    %v396 = vadd.f32 %v355, %v395
    %397 = vmatmul.f32.gmra.mxu0 %v283
    %v398 = vpop.f32.mrf.mxu0
    %v399 = vadd.f32 %v358, %v398
    %400 = vmatmul.f32.gmra.mxu0 %v286
    %v401 = vpop.f32.mrf.mxu0
    %v402 = vadd.f32 %v361, %v401
    %403 = vmatmul.f32.gmra.mxu0 %v289
    %v404 = vpop.f32.mrf.mxu0
    %v405 = vadd.f32 %v364, %v404
    %406 = vmatmul.f32.gmra.mxu0 %v292
    %v407 = vpop.f32.mrf.mxu0
    %v408 = vadd.f32 %v367, %v407
    %409 = vmatmul.f32.gmra.mxu0 %v295
    %v410 = vpop.f32.mrf.mxu0
    %v411 = vadd.f32 %v370, %v410
    %412 = vdwg.mxu0
    %v413 = vld [vmem:[%s4 + $0x3] sm:$0x1]
    %v414 = vperm.slane %v413, 0
    %v415 = vadd.f32 %v390, %v414
    %v416 = vadd.f32 %v393, %v414
    %v417 = vadd.f32 %v396, %v414
    %v418 = vadd.f32 %v399, %v414
    %v419 = vadd.f32 %v402, %v414
    %v420 = vadd.f32 %v405, %v414
    %v421 = vadd.f32 %v408, %v414
    %v422 = vadd.f32 %v411, %v414
    %v423 = vmax.f32 %v415, 0.0
    %v424 = vmax.f32 %v416, 0.0
    %v425 = vmax.f32 %v417, 0.0
    %v426 = vmax.f32 %v418, 0.0
    %v427 = vmax.f32 %v419, 0.0
    %v428 = vmax.f32 %v420, 0.0
    %v429 = vmax.f32 %v421, 0.0
    %v430 = vmax.f32 %v422, 0.0
    %v431 = vld [vmem:[%s4 + $0x4] sm:$0x1]
    %v432 = vperm.slane %v431, 0
    %v433 = vmul.f32 %v423, %v432
    %v434 = vmul.f32 %v424, %v432
    %v435 = vmul.f32 %v425, %v432
    %v436 = vmul.f32 %v426, %v432
    %v437 = vmul.f32 %v427, %v432
    %v438 = vmul.f32 %v428, %v432
    %v439 = vmul.f32 %v429, %v432
    %v440 = vmul.f32 %v430, %v432
    %v441 = vld [vmem:[%s4 + $0x5] sm:$0x1]
    %v442 = vperm.slane %v441, 0
    %v443 = vadd.f32 %v433, %v442
    %v444 = vadd.f32 %v434, %v442
    %v445 = vadd.f32 %v435, %v442
    %v446 = vadd.f32 %v436, %v442
    %v447 = vadd.f32 %v437, %v442
    %v448 = vadd.f32 %v438, %v442
    %v449 = vadd.f32 %v439, %v442
    %v450 = vadd.f32 %v440, %v442
    %451 = vmatpush.msra.mxu0 0.0
    %452 = vmatpush.msra.mxu0 0.0
    %453 = vmatpush.msra.mxu0 0.0
    %454 = vmatpush.msra.mxu0 0.0
    %455 = vmatpush.msra.mxu0 0.0
    %456 = vmatpush.msra.mxu0 0.0
    %457 = vmatpush.msra.mxu0 0.0
    %458 = vmatpush.msra.mxu0 0.0
    %459 = vmatpush.msra.mxu0 %v450
    %460 = vmatpush.msra.mxu0 %v449
    %461 = vmatpush.msra.mxu0 %v448
    %462 = vmatpush.msra.mxu0 %v447
    %463 = vmatpush.msra.mxu0 %v446
    %464 = vmatpush.msra.mxu0 %v445
    %465 = vmatpush.msra.mxu0 %v444
    %466 = vmatpush.msra.mxu0 %v443
    %467 = vmatmul.f32.gmra.mxu0 %v39
    %v468 = vpop.f32.mrf.mxu0
    %v469 = vadd.f32 0.0, %v468
    %470 = vmatmul.f32.gmra.mxu0 %v42
    %v471 = vpop.f32.mrf.mxu0
    %v472 = vadd.f32 0.0, %v471
    %473 = vmatmul.f32.gmra.mxu0 %v45
    %v474 = vpop.f32.mrf.mxu0
    %v475 = vadd.f32 0.0, %v474
    %476 = vmatmul.f32.gmra.mxu0 %v48
    %v477 = vpop.f32.mrf.mxu0
    %v478 = vadd.f32 0.0, %v477
    %479 = vmatmul.f32.gmra.mxu0 %v51
    %v480 = vpop.f32.mrf.mxu0
    %v481 = vadd.f32 0.0, %v480
    %482 = vmatmul.f32.gmra.mxu0 %v54
    %v483 = vpop.f32.mrf.mxu0
    %v484 = vadd.f32 0.0, %v483
    %485 = vmatmul.f32.gmra.mxu0 %v57
    %v486 = vpop.f32.mrf.mxu0
    %v487 = vadd.f32 0.0, %v486
    %488 = vmatmul.f32.gmra.mxu0 %v60
    %v489 = vpop.f32.mrf.mxu0
    %v490 = vadd.f32 0.0, %v489
    %491 = vdwg.mxu0
    %s492 = scalar_lea.vmem %s3, 512
    %v493 = vld [vmem:[%s492] sm:$0xff]
    %v494 = vld [vmem:[%s492 + $0x8] sm:$0xff]
    %v495 = vld [vmem:[%s492 + $0x10] sm:$0xff]
    %v496 = vld [vmem:[%s492 + $0x18] sm:$0xff]
    %v497 = vld [vmem:[%s492 + $0x20] sm:$0xff]
    %v498 = vld [vmem:[%s492 + $0x28] sm:$0xff]
    %v499 = vld [vmem:[%s492 + $0x30] sm:$0xff]
    %v500 = vld [vmem:[%s492 + $0x38] sm:$0xff]
    %v501 = vld [vmem:[%s492 + $0x40] sm:$0xff]
    %v502 = vld [vmem:[%s492 + $0x48] sm:$0xff]
    %v503 = vld [vmem:[%s492 + $0x50] sm:$0xff]
    %v504 = vld [vmem:[%s492 + $0x58] sm:$0xff]
    %v505 = vld [vmem:[%s492 + $0x60] sm:$0xff]
    %v506 = vld [vmem:[%s492 + $0x68] sm:$0xff]
    %v507 = vld [vmem:[%s492 + $0x70] sm:$0xff]
    %v508 = vld [vmem:[%s492 + $0x78] sm:$0xff]
    %s509 = scalar_lea.vmem %s3, 640
    %v510 = vld [vmem:[%s509] sm:$0xff]
    %v511 = vld [vmem:[%s509 + $0x8] sm:$0xff]
    %v512 = vld [vmem:[%s509 + $0x10] sm:$0xff]
    %v513 = vld [vmem:[%s509 + $0x18] sm:$0xff]
    %v514 = vld [vmem:[%s509 + $0x20] sm:$0xff]
    %v515 = vld [vmem:[%s509 + $0x28] sm:$0xff]
    %v516 = vld [vmem:[%s509 + $0x30] sm:$0xff]
    %v517 = vld [vmem:[%s509 + $0x38] sm:$0xff]
    %v518 = vld [vmem:[%s509 + $0x40] sm:$0xff]
    %v519 = vld [vmem:[%s509 + $0x48] sm:$0xff]
    %v520 = vld [vmem:[%s509 + $0x50] sm:$0xff]
    %v521 = vld [vmem:[%s509 + $0x58] sm:$0xff]
    %v522 = vld [vmem:[%s509 + $0x60] sm:$0xff]
    %v523 = vld [vmem:[%s509 + $0x68] sm:$0xff]
    %v524 = vld [vmem:[%s509 + $0x70] sm:$0xff]
    %v525 = vld [vmem:[%s509 + $0x78] sm:$0xff]
    %526 = vmatpush.msra.mxu0 %v525
    %527 = vmatpush.msra.mxu0 %v524
    %528 = vmatpush.msra.mxu0 %v523
    %529 = vmatpush.msra.mxu0 %v522
    %530 = vmatpush.msra.mxu0 %v521
    %531 = vmatpush.msra.mxu0 %v520
    %532 = vmatpush.msra.mxu0 %v519
    %533 = vmatpush.msra.mxu0 %v518
    %534 = vmatpush.msra.mxu0 %v517
    %535 = vmatpush.msra.mxu0 %v516
    %536 = vmatpush.msra.mxu0 %v515
    %537 = vmatpush.msra.mxu0 %v514
    %538 = vmatpush.msra.mxu0 %v513
    %539 = vmatpush.msra.mxu0 %v512
    %540 = vmatpush.msra.mxu0 %v511
    %541 = vmatpush.msra.mxu0 %v510
    %542 = vmatmul.f32.gmra.mxu0 %v443
    %v543 = vpop.f32.mrf.mxu0
    %v544 = vadd.f32 0.0, %v543
    %545 = vmatmul.f32.gmra.mxu0 %v444
    %v546 = vpop.f32.mrf.mxu0
    %v547 = vadd.f32 0.0, %v546
    %548 = vmatmul.f32.gmra.mxu0 %v445
    %v549 = vpop.f32.mrf.mxu0
    %v550 = vadd.f32 0.0, %v549
    %551 = vmatmul.f32.gmra.mxu0 %v446
    %v552 = vpop.f32.mrf.mxu0
    %v553 = vadd.f32 0.0, %v552
    %554 = vmatmul.f32.gmra.mxu0 %v447
    %v555 = vpop.f32.mrf.mxu0
    %v556 = vadd.f32 0.0, %v555
    %557 = vmatmul.f32.gmra.mxu0 %v448
    %v558 = vpop.f32.mrf.mxu0
    %v559 = vadd.f32 0.0, %v558
    %560 = vmatmul.f32.gmra.mxu0 %v449
    %v561 = vpop.f32.mrf.mxu0
    %v562 = vadd.f32 0.0, %v561
    %563 = vmatmul.f32.gmra.mxu0 %v450
    %v564 = vpop.f32.mrf.mxu0
    %v565 = vadd.f32 0.0, %v564
    %566 = vdwg.mxu0
    %567 = vmatpush.msra.mxu0 %v508
    %568 = vmatpush.msra.mxu0 %v507
    %569 = vmatpush.msra.mxu0 %v506
    %570 = vmatpush.msra.mxu0 %v505
    %571 = vmatpush.msra.mxu0 %v504
    %572 = vmatpush.msra.mxu0 %v503
    %573 = vmatpush.msra.mxu0 %v502
    %574 = vmatpush.msra.mxu0 %v501
    %575 = vmatpush.msra.mxu0 %v500
    %576 = vmatpush.msra.mxu0 %v499
    %577 = vmatpush.msra.mxu0 %v498
    %578 = vmatpush.msra.mxu0 %v497
    %579 = vmatpush.msra.mxu0 %v496
    %580 = vmatpush.msra.mxu0 %v495
    %581 = vmatpush.msra.mxu0 %v494
    %582 = vmatpush.msra.mxu0 %v493
    %583 = vmatmul.f32.gmra.mxu0 %v469
    %v584 = vpop.f32.mrf.mxu0
    %v585 = vadd.f32 %v544, %v584
    %586 = vmatmul.f32.gmra.mxu0 %v472
    %v587 = vpop.f32.mrf.mxu0
    %v588 = vadd.f32 %v547, %v587
    %589 = vmatmul.f32.gmra.mxu0 %v475
    %v590 = vpop.f32.mrf.mxu0
    %v591 = vadd.f32 %v550, %v590
    %592 = vmatmul.f32.gmra.mxu0 %v478
    %v593 = vpop.f32.mrf.mxu0
    %v594 = vadd.f32 %v553, %v593
    %595 = vmatmul.f32.gmra.mxu0 %v481
    %v596 = vpop.f32.mrf.mxu0
    %v597 = vadd.f32 %v556, %v596
    %598 = vmatmul.f32.gmra.mxu0 %v484
    %v599 = vpop.f32.mrf.mxu0
    %v600 = vadd.f32 %v559, %v599
    %601 = vmatmul.f32.gmra.mxu0 %v487
    %v602 = vpop.f32.mrf.mxu0
    %v603 = vadd.f32 %v562, %v602
    %604 = vmatmul.f32.gmra.mxu0 %v490
    %v605 = vpop.f32.mrf.mxu0
    %v606 = vadd.f32 %v565, %v605
    %607 = vdwg.mxu0
    %v608 = vld [vmem:[%s4 + $0x6] sm:$0x1]
    %v609 = vperm.slane %v608, 0
    %v610 = vadd.f32 %v585, %v609
    %v611 = vadd.f32 %v588, %v609
    %v612 = vadd.f32 %v591, %v609
    %v613 = vadd.f32 %v594, %v609
    %v614 = vadd.f32 %v597, %v609
    %v615 = vadd.f32 %v600, %v609
    %v616 = vadd.f32 %v603, %v609
    %v617 = vadd.f32 %v606, %v609
    %v618 = vld [vmem:[%s2] sm:$0x3]
    %v620 = vsel %vm37, %v618, 0
    %622 = vmatpush.msra.mxu0 0.0
    %623 = vmatpush.msra.mxu0 0.0
    %624 = vmatpush.msra.mxu0 0.0
    %625 = vmatpush.msra.mxu0 0.0
    %626 = vmatpush.msra.mxu0 0.0
    %627 = vmatpush.msra.mxu0 0.0
    %628 = vmatpush.msra.mxu0 0.0
    %629 = vmatpush.msra.mxu0 0.0
    %630 = vmatpush.msra.mxu0 %v617
    %631 = vmatpush.msra.mxu0 %v616
    %632 = vmatpush.msra.mxu0 %v615
    %633 = vmatpush.msra.mxu0 %v614
    %634 = vmatpush.msra.mxu0 %v613
    %635 = vmatpush.msra.mxu0 %v612
    %636 = vmatpush.msra.mxu0 %v611
    %637 = vmatpush.msra.mxu0 %v610
    %638 = vmatmul.f32.gmra.mxu0 %v620
    %v639 = vpop.f32.mrf.mxu0
    %v640 = vadd.f32 0.0, %v639
    %641 = vdwg.mxu0
    %s642 = scalar_lea.vmem %s3, 768
    %v643 = vld [vmem:[%s642] sm:$0xff]
    %v644 = vld [vmem:[%s642 + $0x8] sm:$0xff]
    %v645 = vld [vmem:[%s642 + $0x10] sm:$0xff]
    %v646 = vld [vmem:[%s642 + $0x18] sm:$0xff]
    %v647 = vld [vmem:[%s642 + $0x20] sm:$0xff]
    %v648 = vld [vmem:[%s642 + $0x28] sm:$0xff]
    %v649 = vld [vmem:[%s642 + $0x30] sm:$0xff]
    %v650 = vld [vmem:[%s642 + $0x38] sm:$0xff]
    %v651 = vld [vmem:[%s642 + $0x40] sm:$0xff]
    %v652 = vld [vmem:[%s642 + $0x48] sm:$0xff]
    %v653 = vld [vmem:[%s642 + $0x50] sm:$0xff]
    %v654 = vld [vmem:[%s642 + $0x58] sm:$0xff]
    %v655 = vld [vmem:[%s642 + $0x60] sm:$0xff]
    %v656 = vld [vmem:[%s642 + $0x68] sm:$0xff]
    %v657 = vld [vmem:[%s642 + $0x70] sm:$0xff]
    %v658 = vld [vmem:[%s642 + $0x78] sm:$0xff]
    %v659 = vld [vmem:[%s4 + $0x7] sm:$0x1]
    %v660 = vperm.slane %v659, 0
    %661 = vmatpush.msra.mxu0 %v658
    %662 = vmatpush.msra.mxu0 %v657
    %663 = vmatpush.msra.mxu0 %v656
    %664 = vmatpush.msra.mxu0 %v655
    %665 = vmatpush.msra.mxu0 %v654
    %666 = vmatpush.msra.mxu0 %v653
    %667 = vmatpush.msra.mxu0 %v652
    %668 = vmatpush.msra.mxu0 %v651
    %669 = vmatpush.msra.mxu0 %v650
    %670 = vmatpush.msra.mxu0 %v649
    %671 = vmatpush.msra.mxu0 %v648
    %672 = vmatpush.msra.mxu0 %v647
    %673 = vmatpush.msra.mxu0 %v646
    %674 = vmatpush.msra.mxu0 %v645
    %675 = vmatpush.msra.mxu0 %v644
    %676 = vmatpush.msra.mxu0 %v643
    %677 = vmatmul.f32.gmra.mxu0 %v640
    %v678 = vpop.f32.mrf.mxu0
    %v679 = vadd.f32 %v660, %v678
    %680 = vdwg.mxu0
    %vm681 = vcmask 25600
    %682 = vst.msk [vmem:[#allocation2] sm:$0x3] %vm681, %v679
    // Predicated region
    $region22: #{gcn_forward.1} parent=1 // pred_check
      _
    $region23: #{gcn_forward.1} parent=1 // pred_check_branch
      %684 = sbr.rel (0) target = $region25
    $region24: #{gcn_forward.1} parent=1 // pred_region
      %686 = vsyncadd [#allocation3], 0
      %s688 = sshll.u32 [#allocation2], 4
      %s689 = int_to_ptr.vmem [resolvable:$true] %s688
      %s690 = sshll.u32 %s5, 4
      %s691 = int_to_ptr.hbm [resolvable:$true] %s690
      %693 = dma.vmem_to_hbm [thread:$0]  %s689, 32, %s691, [#allocation3]
    $region25: #{gcn_forward.1} parent=1 // pred_fallthru
      _
    // Predicated region
    $region26: #{gcn_forward.1} parent=1 // pred_check
      _
    $region27: #{gcn_forward.1} parent=1 // pred_check_branch
      %695 = sbr.rel (0) target = $region29
    $region28: #{gcn_forward.1} parent=1 // pred_region
      %697 = dma.done [#allocation3], 32
    $region29: #{gcn_forward.1} parent=1 // pred_fallthru
      _
    %698 = vsyncpa [#allocation3], 1

</llo_original>
